<compile_context>
chip_gen: v7x
topology: tpu7x:2x2x1
jax: 0.10.0
libtpu: 0.0.40
codegen_flags: <defaults>
</compile_context>

<pallas_src>
import functools

import jax
import jax.numpy as jnp
import numpy as np
from jax import lax
from jax.experimental import pallas as pl
from jax.experimental.pallas import tpu as pltpu


def mobile_shuffle_kernel(x_ref, wf_ref, prm_ref, o_ref, col_ref, *,
                          height, width, ksize, crd, lane_pack, n_groups):
    """One grid step = lane_pack * n_groups images, lane-stacked along the lane axis."""
    H, W, K = height, width, ksize
    pad = K // 2
    Cin = x_ref.shape[0]
    M = H * W
    Ng = lane_pack * M                               # lanes per lane-stacked group

    # --- lane-index helpers for boundary masks, shape (1, Ng): h = (m mod M)//W ---
    lane = lax.broadcasted_iota(jnp.int32, (1, Ng), 1)
    if (M & (M - 1)) == 0 and (W & (W - 1)) == 0:    # power-of-two fast path (no vec div)
        m_loc = lane & (M - 1)
        ww = m_loc & (W - 1)
        hh = m_loc >> (W.bit_length() - 1)
    else:
        m_loc = lane % M
        hh = m_loc // W
        ww = m_loc - hh * W

    # --- unpack the single packed parameter operand (one DMA instead of five) ---
    wf = wf_ref[...]                                 # (Cout, K*K*Cin) folded conv weights
    bias = prm_ref[:, 0:1]                           # (Cout, 1)
    se_rw = prm_ref[:, 1:1 + crd]                    # (Cout, crd)
    se_ewt = prm_ref[:, 1 + crd:1 + 2 * crd]         # (Cout, crd)  (expand weight, transposed)
    se_eb = prm_ref[:, 1 + 2 * crd:2 + 2 * crd]      # (Cout, 1)
    se_rb = prm_ref[0:1, 2 + 2 * crd:2 + 3 * crd]    # (1, crd)     (replicated rows)

    for g in range(n_groups):
        x = x_ref[:, g * Ng:(g + 1) * Ng]            # (Cin, Ng) lane-dense slab

        # im2col (transposed), streamed tap-by-tap into VMEM scratch.
        # Each tap is a flat lane shift (pltpu.roll -> XLU) with out-of-image (and
        # cross-image) positions zeroed by the (1, Ng) iota mask (implicit zero pad).
        t = 0
        for kh in range(K):
            for kw in range(K):
                dh, dw = kh - pad, kw - pad
                s = dh * W + dw
                tap = x if s == 0 else pltpu.roll(x, shift=(-s) % Ng, axis=1)
                conds = []
                if dh < 0:
                    conds.append(hh >= -dh)
                if dh > 0:
                    conds.append(hh < H - dh)
                if dw < 0:
                    conds.append(ww >= -dw)
                if dw > 0:
                    conds.append(ww < W - dw)
                if conds:
                    mask = conds[0]
                    for c in conds[1:]:
                        mask = mask & c
                    tap = jnp.where(mask, tap, 0.0)   # (1,Ng) mask broadcast over Cin sublanes
                col_ref[t * Cin:(t + 1) * Cin, :] = tap
                t += 1

        # Single MXU matmul for all three folded branches (3x3 + 1x1 + identity-BN).
        acc = jnp.dot(wf, col_ref[...], preferred_element_type=jnp.float32) + bias  # (Cout, Ng)

        # Squeeze-and-Excite per image (crd tiny -> VPU/XLU, no MXU round trips),
        # then scale + final ReLU; every store is a 256-lane-aligned unmasked vst.
        for i in range(lane_pack):
            a = acc[:, i * M:(i + 1) * M]                                      # (Cout, M)
            pooled = jnp.mean(a, axis=1, keepdims=True)                        # (Cout, 1)
            hidden = jnp.sum(pooled * se_rw, axis=0, keepdims=True) + se_rb    # (1, crd)
            hidden = jnp.maximum(hidden, 0.0)
            gate = jnp.sum(hidden * se_ewt, axis=1, keepdims=True) + se_eb     # (Cout, 1)
            gate = jax.nn.sigmoid(gate)
            o_ref[:, g * Ng + i * M:g * Ng + (i + 1) * M] = jnp.maximum(a * gate, 0.0)


def _pick_batch_tile(batch, cap=16):
    """Largest divisor of `batch` <= cap that still leaves >=2 grid steps (v7x 2 TCs)."""
    best = 1
    for bt in range(1, min(batch, cap) + 1):
        if batch % bt == 0 and (batch // bt >= 2 or batch <= 1):
            best = bt
    return best


def _pick_lane_pack(batch_tile, cap=4):
    """Images lane-stacked per inner matmul (bounds live-vreg pressure)."""
    for lp in range(min(batch_tile, cap), 0, -1):
        if batch_tile % lp == 0:
            return lp
    return 1


def mobile_shuffle_block(x_nchw, kp, batch_tile=None):
    """x_nchw: (B, Cin, H, W) f32 (PyTorch layout). Returns (B, Cout, H, W) f32."""
    B, Cin, H, W = x_nchw.shape
    w_flat = kp["w_flat"]
    Cout = w_flat.shape[0]
    K = kp["ksize"]
    crd = kp["crd"]
    M = H * W

    bt = batch_tile if batch_tile is not None else _pick_batch_tile(B)
    lp = _pick_lane_pack(bt)
    ng = bt // lp
    n_steps = B // bt

    # Lane-dense layout: images stacked along the lane axis (layout plumbing in XLA).
    x_cbm = jnp.transpose(x_nchw.reshape(B, Cin, M), (1, 0, 2)).reshape(Cin, B * M)

    kernel = functools.partial(mobile_shuffle_kernel, height=H, width=W, ksize=K,
                               crd=crd, lane_pack=lp, n_groups=ng)

    out = pl.pallas_call(
        kernel,
        out_shape=jax.ShapeDtypeStruct((Cout, B * M), jnp.float32),
        grid_spec=pltpu.PrefetchScalarGridSpec(
            num_scalar_prefetch=0,
            grid=(n_steps,),
            in_specs=[
                pl.BlockSpec((Cin, bt * M), lambda b: (0, b)),            # bt images / step
                pl.BlockSpec((Cout, K * K * Cin), lambda b: (0, 0)),      # folded conv weights
                pl.BlockSpec((Cout, 2 + 3 * crd), lambda b: (0, 0)),      # packed bias + SE params
            ],
            out_specs=pl.BlockSpec((Cout, bt * M), lambda b: (0, b)),
            scratch_shapes=[pltpu.VMEM((K * K * Cin, lp * M), jnp.float32)],  # streamed im2col
        ),
        compiler_params=pltpu.CompilerParams(
            dimension_semantics=("parallel",)),       # v7x: grid steps shard across both TCs
    )(x_cbm, w_flat, kp["prm"])

    return jnp.transpose(out.reshape(Cout, B, M), (1, 0, 2)).reshape(B, Cout, H, W)


# ----------------------------- parameter glue --------------------------------

def fuse_bn(gamma, beta, mean, var, eps=1e-5):
    std = jnp.sqrt(var + eps)
    scale = gamma / std
    return scale, beta - mean * scale


def make_params(key, cin=16, cout=16, k=3, rd_ratio=0.0625, eps=1e-5):
    """Per-branch (BN-folded, eval-style) parameters, as the PyTorch module holds them."""
    ks = jax.random.split(key, 16)
    nrm = lambda kk, shp, s=0.1: (s * jax.random.normal(kk, shp)).astype(jnp.float32)
    pos = lambda kk, shp: (0.5 + jax.random.uniform(kk, shp)).astype(jnp.float32)

    # KxK conv-bn branch (weights HWIO)
    w3_raw = nrm(ks[0], (k, k, cin, cout))
    g3, b3, m3, v3 = pos(ks[1], (cout,)), nrm(ks[2], (cout,)), nrm(ks[3], (cout,)), pos(ks[4], (cout,))
    s3, bias3 = fuse_bn(g3, b3, m3, v3, eps)
    w3 = w3_raw * s3[None, None, None, :]

    # 1x1 conv-bn "scale" branch
    w1_raw = nrm(ks[5], (cin, cout))
    g1, b1, m1, v1 = pos(ks[6], (cout,)), nrm(ks[7], (cout,)), nrm(ks[8], (cout,)), pos(ks[9], (cout,))
    s1, bias1 = fuse_bn(g1, b1, m1, v1, eps)
    w1 = w1_raw * s1[None, :]

    # identity BN branch (requires cin == cout, stride == 1)
    gi, bi, mi, vi = pos(ks[10], (cin,)), nrm(ks[11], (cin,)), nrm(ks[12], (cin,)), pos(ks[13], (cin,))
    si, biasi = fuse_bn(gi, bi, mi, vi, eps)

    # SE block (1x1 convs as matrices)
    crd = max(1, int(cout * rd_ratio))
    return {
        "w3": w3, "b3": bias3,
        "w1": w1, "b1": bias1,
        "id_scale": si, "id_bias": biasi,
        "se_rw": nrm(ks[14], (cout, crd)),
        "se_rb": jnp.full((crd,), 0.05, jnp.float32),
        "se_ew": nrm(ks[15], (crd, cout)),
        "se_eb": jnp.full((cout,), -0.1, jnp.float32),
    }


def fuse_for_kernel(p):
    """Fold 1x1 + identity-BN into the KxK kernel (RepVGG-style) and pack the five
    tiny SE/bias operands into a single (Cout, 2+3*crd) array for one DMA."""
    w3 = p["w3"]                                   # (K, K, Cin, Cout) HWIO
    K, _, cin, cout = w3.shape
    assert cin == cout, "identity-BN branch requires in_channels == out_channels (stride==1)"
    c = K // 2
    center = w3[c, c] + p["w1"] + jnp.eye(cin, cout, dtype=w3.dtype) * p["id_scale"][:, None]
    w_all = w3.at[c, c].set(center)
    bias = p["b3"] + p["b1"] + p["id_bias"]
    # (Cout, K*K*Cin), (kh, kw) major / ci minor — matches the kernel's im2col ordering
    w_flat = jnp.transpose(w_all, (3, 0, 1, 2)).reshape(cout, K * K * cin)

    crd = p["se_rw"].shape[1]
    prm = jnp.concatenate([
        bias.reshape(cout, 1),                                       # col 0
        p["se_rw"],                                                  # cols 1..1+crd
        jnp.transpose(p["se_ew"]),                                   # cols 1+crd..1+2crd
        p["se_eb"].reshape(cout, 1),                                 # col 1+2crd
        jnp.broadcast_to(p["se_rb"].reshape(1, crd), (cout, crd)),   # cols 2+2crd.. (row-replicated)
    ], axis=1).astype(jnp.float32)

    return {"w_flat": w_flat, "prm": prm, "ksize": int(K), "crd": int(crd)}


def reference(x, p):
    """Pure-JAX reference of the original multi-branch forward (NCHW)."""
    conv3 = lax.conv_general_dilated(
        x, p["w3"], window_strides=(1, 1), padding=((1, 1), (1, 1)),
        dimension_numbers=("NCHW", "HWIO", "NCHW")) + p["b3"][None, :, None, None]
    conv1 = jnp.einsum("bihw,io->bohw", x, p["w1"]) + p["b1"][None, :, None, None]
    ident = x * p["id_scale"][None, :, None, None] + p["id_bias"][None, :, None, None]
    out = conv3 + conv1 + ident
    pooled = out.mean(axis=(2, 3))                                   # (B, C)
    se = jax.nn.relu(pooled @ p["se_rw"] + p["se_rb"])
    se = jax.nn.sigmoid(se @ p["se_ew"] + p["se_eb"])
    return jax.nn.relu(out * se[:, :, None, None])


if __name__ == "__main__":
    key = jax.random.PRNGKey(0)
    kx, kp = jax.random.split(key)

    B, C, H, W = 2, 16, 16, 16                     # PyTorch-equivalent NCHW input
    x = jax.random.normal(kx, (B, C, H, W), dtype=jnp.float32)

    branch_params = make_params(kp, cin=C, cout=C, k=3)
    kernel_params = fuse_for_kernel(branch_params)

    # Toy case: B=2 -> one image per grid step (one per TC on v7x).
    out = jax.block_until_ready(mobile_shuffle_block(x, kernel_params))
    ref = jax.block_until_ready(reference(x, branch_params))
    np.testing.assert_allclose(np.asarray(out), np.asarray(ref), rtol=1e-4, atol=1e-4)

    # Also exercise the lane-stacked batching path (batch_tile=4, lane_pack=4).
    x8 = jax.random.normal(jax.random.PRNGKey(1), (8, C, H, W), dtype=jnp.float32)
    out8 = jax.block_until_ready(mobile_shuffle_block(x8, kernel_params))
    ref8 = jax.block_until_ready(reference(x8, branch_params))
    np.testing.assert_allclose(np.asarray(out8), np.asarray(ref8), rtol=1e-4, atol=1e-4)

    print("KERNEL_OK")
</pallas_src>

<mosaic_0001>
module attributes {stable_mosaic.version = 11 : i64} {
  func.func @mobile_shuffle_kernel(%arg0: i32, %arg1: memref<16x256xf32, #tpu.memory_space<vmem>>, %arg2: memref<16x144xf32, #tpu.memory_space<vmem>>, %arg3: memref<16x5xf32, #tpu.memory_space<vmem>>, %arg4: memref<16x256xf32, #tpu.memory_space<vmem>>, %arg5: memref<144x256xf32, #tpu.memory_space<vmem>>) attributes {dimension_semantics = [#tpu.dimension_semantics<parallel>], iteration_bounds = array<i64: 2>, scalar_prefetch = 0 : i64, scratch_operands = 1 : i64, tpu.core_type = #tpu.core_type<tc>, window_params = [{transform_indices = @transform_0, window_bounds = array<i64: 16, 256>}, {pipeline_mode = #tpu.pipeline_mode<synchronous>, transform_indices = @transform_1, window_bounds = array<i64: 16, 144>}, {pipeline_mode = #tpu.pipeline_mode<synchronous>, transform_indices = @transform_2, window_bounds = array<i64: 16, 5>}, {transform_indices = @transform_3, window_bounds = array<i64: 16, 256>}]} {
    %0 = tpu.iota {dimensions = array<i32: 1>} : vector<1x256xi32>
    %c255_i32 = arith.constant 255 : i32
    %1 = vector.broadcast %c255_i32 : i32 to vector<1x256xi32>
    %2 = arith.andi %0, %1 : vector<1x256xi32>
    %c15_i32 = arith.constant 15 : i32
    %3 = vector.broadcast %c15_i32 : i32 to vector<1x256xi32>
    %4 = arith.andi %2, %3 : vector<1x256xi32>
    %c4_i32 = arith.constant 4 : i32
    %5 = vector.broadcast %c4_i32 : i32 to vector<1x256xi32>
    %6 = arith.shrsi %2, %5 : vector<1x256xi32>
    %c0 = arith.constant 0 : index
    %c0_0 = arith.constant 0 : index
    %7 = vector.load %arg2[%c0, %c0_0] : memref<16x144xf32, #tpu.memory_space<vmem>>, vector<16x144xf32>
    %c0_1 = arith.constant 0 : index
    %c0_2 = arith.constant 0 : index
    %8 = vector.load %arg3[%c0_1, %c0_2] : memref<16x5xf32, #tpu.memory_space<vmem>>, vector<16x1xf32>
    %c0_3 = arith.constant 0 : index
    %c1 = arith.constant 1 : index
    %9 = vector.load %arg3[%c0_3, %c1] : memref<16x5xf32, #tpu.memory_space<vmem>>, vector<16x1xf32>
    %c0_4 = arith.constant 0 : index
    %c2 = arith.constant 2 : index
    %10 = vector.load %arg3[%c0_4, %c2] : memref<16x5xf32, #tpu.memory_space<vmem>>, vector<16x1xf32>
    %c0_5 = arith.constant 0 : index
    %c3 = arith.constant 3 : index
    %11 = vector.load %arg3[%c0_5, %c3] : memref<16x5xf32, #tpu.memory_space<vmem>>, vector<16x1xf32>
    %c0_6 = arith.constant 0 : index
    %c4 = arith.constant 4 : index
    %12 = vector.load %arg3[%c0_6, %c4] : memref<16x5xf32, #tpu.memory_space<vmem>>, vector<1x1xf32>
    %c0_7 = arith.constant 0 : index
    %c0_8 = arith.constant 0 : index
    %13 = vector.load %arg1[%c0_7, %c0_8] : memref<16x256xf32, #tpu.memory_space<vmem>>, vector<16x256xf32>
    %c17_i32 = arith.constant 17 : i32
    %14 = tpu.dynamic_rotate %13 by %c17_i32 dim 1 : vector<16x256xf32>, i32 -> vector<16x256xf32>
    %c1_i32 = arith.constant 1 : i32
    %15 = vector.broadcast %c1_i32 : i32 to vector<1x256xi32>
    %16 = arith.cmpi sge, %6, %15 : vector<1x256xi32>
    %c1_i32_9 = arith.constant 1 : i32
    %17 = vector.broadcast %c1_i32_9 : i32 to vector<1x256xi32>
    %18 = arith.cmpi sge, %4, %17 : vector<1x256xi32>
    %19 = arith.andi %16, %18 : vector<1x256xi1>
    %cst = arith.constant 0.000000e+00 : f32
    %20 = vector.shape_cast %19 : vector<1x256xi1> to vector<1x256xi1>
    %21 = vector.broadcast %20 : vector<1x256xi1> to vector<16x256xi1>
    %22 = vector.broadcast %cst : f32 to vector<16x256xf32>
    %23 = arith.select %21, %14, %22 : vector<16x256xi1>, vector<16x256xf32>
    %c0_10 = arith.constant 0 : index
    %c0_11 = arith.constant 0 : index
    %24 = vector.load %arg5[%c0_10, %c0_11] : memref<144x256xf32, #tpu.memory_space<vmem>>, vector<16x256xf32>
    tpu.vector_store %arg5[%c0_10, %c0_11], %23 {strides = array<i32>} : memref<144x256xf32, #tpu.memory_space<vmem>>, vector<16x256xf32>,
    %c16_i32 = arith.constant 16 : i32
    %25 = tpu.dynamic_rotate %13 by %c16_i32 dim 1 : vector<16x256xf32>, i32 -> vector<16x256xf32>
    %c1_i32_12 = arith.constant 1 : i32
    %26 = vector.broadcast %c1_i32_12 : i32 to vector<1x256xi32>
    %27 = arith.cmpi sge, %6, %26 : vector<1x256xi32>
    %cst_13 = arith.constant 0.000000e+00 : f32
    %28 = vector.shape_cast %27 : vector<1x256xi1> to vector<1x256xi1>
    %29 = vector.broadcast %28 : vector<1x256xi1> to vector<16x256xi1>
    %30 = vector.broadcast %cst_13 : f32 to vector<16x256xf32>
    %31 = arith.select %29, %25, %30 : vector<16x256xi1>, vector<16x256xf32>
    %c16 = arith.constant 16 : index
    %c0_14 = arith.constant 0 : index
    %32 = vector.load %arg5[%c16, %c0_14] : memref<144x256xf32, #tpu.memory_space<vmem>>, vector<16x256xf32>
    tpu.vector_store %arg5[%c16, %c0_14], %31 {strides = array<i32>} : memref<144x256xf32, #tpu.memory_space<vmem>>, vector<16x256xf32>,
    %c15_i32_15 = arith.constant 15 : i32
    %33 = tpu.dynamic_rotate %13 by %c15_i32_15 dim 1 : vector<16x256xf32>, i32 -> vector<16x256xf32>
    %c1_i32_16 = arith.constant 1 : i32
    %34 = vector.broadcast %c1_i32_16 : i32 to vector<1x256xi32>
    %35 = arith.cmpi sge, %6, %34 : vector<1x256xi32>
    %c15_i32_17 = arith.constant 15 : i32
    %36 = vector.broadcast %c15_i32_17 : i32 to vector<1x256xi32>
    %37 = arith.cmpi slt, %4, %36 : vector<1x256xi32>
    %38 = arith.andi %35, %37 : vector<1x256xi1>
    %cst_18 = arith.constant 0.000000e+00 : f32
    %39 = vector.shape_cast %38 : vector<1x256xi1> to vector<1x256xi1>
    %40 = vector.broadcast %39 : vector<1x256xi1> to vector<16x256xi1>
    %41 = vector.broadcast %cst_18 : f32 to vector<16x256xf32>
    %42 = arith.select %40, %33, %41 : vector<16x256xi1>, vector<16x256xf32>
    %c32 = arith.constant 32 : index
    %c0_19 = arith.constant 0 : index
    %43 = vector.load %arg5[%c32, %c0_19] : memref<144x256xf32, #tpu.memory_space<vmem>>, vector<16x256xf32>
    tpu.vector_store %arg5[%c32, %c0_19], %42 {strides = array<i32>} : memref<144x256xf32, #tpu.memory_space<vmem>>, vector<16x256xf32>,
    %c1_i32_20 = arith.constant 1 : i32
    %44 = tpu.dynamic_rotate %13 by %c1_i32_20 dim 1 : vector<16x256xf32>, i32 -> vector<16x256xf32>
    %c1_i32_21 = arith.constant 1 : i32
    %45 = vector.broadcast %c1_i32_21 : i32 to vector<1x256xi32>
    %46 = arith.cmpi sge, %4, %45 : vector<1x256xi32>
    %cst_22 = arith.constant 0.000000e+00 : f32
    %47 = vector.shape_cast %46 : vector<1x256xi1> to vector<1x256xi1>
    %48 = vector.broadcast %47 : vector<1x256xi1> to vector<16x256xi1>
    %49 = vector.broadcast %cst_22 : f32 to vector<16x256xf32>
    %50 = arith.select %48, %44, %49 : vector<16x256xi1>, vector<16x256xf32>
    %c48 = arith.constant 48 : index
    %c0_23 = arith.constant 0 : index
    %51 = vector.load %arg5[%c48, %c0_23] : memref<144x256xf32, #tpu.memory_space<vmem>>, vector<16x256xf32>
    tpu.vector_store %arg5[%c48, %c0_23], %50 {strides = array<i32>} : memref<144x256xf32, #tpu.memory_space<vmem>>, vector<16x256xf32>,
    %c64 = arith.constant 64 : index
    %c0_24 = arith.constant 0 : index
    %52 = vector.load %arg5[%c64, %c0_24] : memref<144x256xf32, #tpu.memory_space<vmem>>, vector<16x256xf32>
    tpu.vector_store %arg5[%c64, %c0_24], %13 {strides = array<i32>} : memref<144x256xf32, #tpu.memory_space<vmem>>, vector<16x256xf32>,
    %c255_i32_25 = arith.constant 255 : i32
    %53 = tpu.dynamic_rotate %13 by %c255_i32_25 dim 1 : vector<16x256xf32>, i32 -> vector<16x256xf32>
    %c15_i32_26 = arith.constant 15 : i32
    %54 = vector.broadcast %c15_i32_26 : i32 to vector<1x256xi32>
    %55 = arith.cmpi slt, %4, %54 : vector<1x256xi32>
    %cst_27 = arith.constant 0.000000e+00 : f32
    %56 = vector.shape_cast %55 : vector<1x256xi1> to vector<1x256xi1>
    %57 = vector.broadcast %56 : vector<1x256xi1> to vector<16x256xi1>
    %58 = vector.broadcast %cst_27 : f32 to vector<16x256xf32>
    %59 = arith.select %57, %53, %58 : vector<16x256xi1>, vector<16x256xf32>
    %c80 = arith.constant 80 : index
    %c0_28 = arith.constant 0 : index
    %60 = vector.load %arg5[%c80, %c0_28] : memref<144x256xf32, #tpu.memory_space<vmem>>, vector<16x256xf32>
    tpu.vector_store %arg5[%c80, %c0_28], %59 {strides = array<i32>} : memref<144x256xf32, #tpu.memory_space<vmem>>, vector<16x256xf32>,
    %c241_i32 = arith.constant 241 : i32
    %61 = tpu.dynamic_rotate %13 by %c241_i32 dim 1 : vector<16x256xf32>, i32 -> vector<16x256xf32>
    %c15_i32_29 = arith.constant 15 : i32
    %62 = vector.broadcast %c15_i32_29 : i32 to vector<1x256xi32>
    %63 = arith.cmpi slt, %6, %62 : vector<1x256xi32>
    %c1_i32_30 = arith.constant 1 : i32
    %64 = vector.broadcast %c1_i32_30 : i32 to vector<1x256xi32>
    %65 = arith.cmpi sge, %4, %64 : vector<1x256xi32>
    %66 = arith.andi %63, %65 : vector<1x256xi1>
    %cst_31 = arith.constant 0.000000e+00 : f32
    %67 = vector.shape_cast %66 : vector<1x256xi1> to vector<1x256xi1>
    %68 = vector.broadcast %67 : vector<1x256xi1> to vector<16x256xi1>
    %69 = vector.broadcast %cst_31 : f32 to vector<16x256xf32>
    %70 = arith.select %68, %61, %69 : vector<16x256xi1>, vector<16x256xf32>
    %c96 = arith.constant 96 : index
    %c0_32 = arith.constant 0 : index
    %71 = vector.load %arg5[%c96, %c0_32] : memref<144x256xf32, #tpu.memory_space<vmem>>, vector<16x256xf32>
    tpu.vector_store %arg5[%c96, %c0_32], %70 {strides = array<i32>} : memref<144x256xf32, #tpu.memory_space<vmem>>, vector<16x256xf32>,
    %c240_i32 = arith.constant 240 : i32
    %72 = tpu.dynamic_rotate %13 by %c240_i32 dim 1 : vector<16x256xf32>, i32 -> vector<16x256xf32>
    %c15_i32_33 = arith.constant 15 : i32
    %73 = vector.broadcast %c15_i32_33 : i32 to vector<1x256xi32>
    %74 = arith.cmpi slt, %6, %73 : vector<1x256xi32>
    %cst_34 = arith.constant 0.000000e+00 : f32
    %75 = vector.shape_cast %74 : vector<1x256xi1> to vector<1x256xi1>
    %76 = vector.broadcast %75 : vector<1x256xi1> to vector<16x256xi1>
    %77 = vector.broadcast %cst_34 : f32 to vector<16x256xf32>
    %78 = arith.select %76, %72, %77 : vector<16x256xi1>, vector<16x256xf32>
    %c112 = arith.constant 112 : index
    %c0_35 = arith.constant 0 : index
    %79 = vector.load %arg5[%c112, %c0_35] : memref<144x256xf32, #tpu.memory_space<vmem>>, vector<16x256xf32>
    tpu.vector_store %arg5[%c112, %c0_35], %78 {strides = array<i32>} : memref<144x256xf32, #tpu.memory_space<vmem>>, vector<16x256xf32>,
    %c239_i32 = arith.constant 239 : i32
    %80 = tpu.dynamic_rotate %13 by %c239_i32 dim 1 : vector<16x256xf32>, i32 -> vector<16x256xf32>
    %c15_i32_36 = arith.constant 15 : i32
    %81 = vector.broadcast %c15_i32_36 : i32 to vector<1x256xi32>
    %82 = arith.cmpi slt, %6, %81 : vector<1x256xi32>
    %c15_i32_37 = arith.constant 15 : i32
    %83 = vector.broadcast %c15_i32_37 : i32 to vector<1x256xi32>
    %84 = arith.cmpi slt, %4, %83 : vector<1x256xi32>
    %85 = arith.andi %82, %84 : vector<1x256xi1>
    %cst_38 = arith.constant 0.000000e+00 : f32
    %86 = vector.shape_cast %85 : vector<1x256xi1> to vector<1x256xi1>
    %87 = vector.broadcast %86 : vector<1x256xi1> to vector<16x256xi1>
    %88 = vector.broadcast %cst_38 : f32 to vector<16x256xf32>
    %89 = arith.select %87, %80, %88 : vector<16x256xi1>, vector<16x256xf32>
    %c128 = arith.constant 128 : index
    %c0_39 = arith.constant 0 : index
    %90 = vector.load %arg5[%c128, %c0_39] : memref<144x256xf32, #tpu.memory_space<vmem>>, vector<16x256xf32>
    tpu.vector_store %arg5[%c128, %c0_39], %89 {strides = array<i32>} : memref<144x256xf32, #tpu.memory_space<vmem>>, vector<16x256xf32>,
    %c0_40 = arith.constant 0 : index
    %c0_41 = arith.constant 0 : index
    %91 = vector.load %arg5[%c0_40, %c0_41] : memref<144x256xf32, #tpu.memory_space<vmem>>, vector<144x256xf32>
    %cst_42 = arith.constant dense<0.000000e+00> : vector<16x256xf32>
    %92 = tpu.matmul %7, %91, %cst_42 {dimension_numbers = #tpu.dot_dimension_numbers<[1], [0], [0], [1], [0, 0, 1, 1], [], []>} : vector<16x144xf32>, vector<144x256xf32>, vector<16x256xf32> -> vector<16x256xf32>
    %93 = vector.broadcast %8 : vector<16x1xf32> to vector<16x256xf32>
    %94 = arith.addf %92, %93 : vector<16x256xf32>
    %cst_43 = arith.constant dense<0.000000e+00> : vector<16xf32>
    %95 = vector.multi_reduction <add>, %94, %cst_43 [1] : vector<16x256xf32> to vector<16xf32>
    %96 = vector.shape_cast %95 : vector<16xf32> to vector<16x1xf32>
    %cst_44 = arith.constant 2.560000e+02 : f32
    %97 = vector.broadcast %cst_44 : f32 to vector<16x1xf32>
    %98 = arith.divf %96, %97 : vector<16x1xf32>
    %99 = arith.mulf %98, %9 : vector<16x1xf32>
    %cst_45 = arith.constant dense<0.000000e+00> : vector<1xf32>
    %100 = vector.multi_reduction <add>, %99, %cst_45 [0] : vector<16x1xf32> to vector<1xf32>
    %101 = vector.shape_cast %100 : vector<1xf32> to vector<1x1xf32>
    %102 = arith.addf %101, %12 : vector<1x1xf32>
    %cst_46 = arith.constant 0.000000e+00 : f32
    %103 = vector.broadcast %cst_46 : f32 to vector<1x1xf32>
    %104 = arith.maximumf %102, %103 : vector<1x1xf32>
    %105 = vector.broadcast %104 : vector<1x1xf32> to vector<16x1xf32>
    %106 = arith.mulf %105, %10 : vector<16x1xf32>
    %cst_47 = arith.constant dense<0.000000e+00> : vector<16xf32>
    %107 = vector.multi_reduction <add>, %106, %cst_47 [1] : vector<16x1xf32> to vector<16xf32>
    %108 = vector.shape_cast %107 : vector<16xf32> to vector<16x1xf32>
    %109 = arith.addf %108, %11 : vector<16x1xf32>
    %110 = arith.negf %109 : vector<16x1xf32>
    %111 = math.exp %110 : vector<16x1xf32>
    %cst_48 = arith.constant 1.000000e+00 : f32
    %112 = vector.broadcast %cst_48 : f32 to vector<16x1xf32>
    %113 = arith.addf %112, %111 : vector<16x1xf32>
    %114 = arith.divf %112, %113 : vector<16x1xf32>
    %115 = vector.broadcast %114 : vector<16x1xf32> to vector<16x256xf32>
    %116 = arith.mulf %94, %115 : vector<16x256xf32>
    %cst_49 = arith.constant 0.000000e+00 : f32
    %117 = vector.broadcast %cst_49 : f32 to vector<16x256xf32>
    %118 = arith.maximumf %116, %117 : vector<16x256xf32>
    %c0_50 = arith.constant 0 : index
    %c0_51 = arith.constant 0 : index
    %119 = vector.load %arg4[%c0_50, %c0_51] : memref<16x256xf32, #tpu.memory_space<vmem>>, vector<16x256xf32>
    tpu.vector_store %arg4[%c0_50, %c0_51], %118 {strides = array<i32>} : memref<16x256xf32, #tpu.memory_space<vmem>>, vector<16x256xf32>,
    return
  }
  func.func @transform_0(%arg0: i32) -> (i32, i32) {
    %c0_i32 = arith.constant 0 : i32
    %c0_i32_0 = arith.constant 0 : i32
    return %c0_i32, %arg0 : i32, i32
  }
  func.func @transform_1(%arg0: i32) -> (i32, i32) {
    %c0_i32 = arith.constant 0 : i32
    %c0_i32_0 = arith.constant 0 : i32
    %c0_i32_1 = arith.constant 0 : i32
    return %c0_i32, %c0_i32_0 : i32, i32
  }
  func.func @transform_2(%arg0: i32) -> (i32, i32) {
    %c0_i32 = arith.constant 0 : i32
    %c0_i32_0 = arith.constant 0 : i32
    %c0_i32_1 = arith.constant 0 : i32
    return %c0_i32, %c0_i32_0 : i32, i32
  }
  func.func @transform_3(%arg0: i32) -> (i32, i32) {
    %c0_i32 = arith.constant 0 : i32
    %c0_i32_0 = arith.constant 0 : i32
    return %c0_i32, %arg0 : i32, i32
  }
}

</mosaic_0001>

<llo_original>
// kernel: tpu_custom_call.1
$region0: #{tpu_custom_call.1}
  #allocation0 [shape = 'u32[]', space=smem, size = 0x4, offset = 0x4, fixed_abs, tag = 'smem constant byte address 0x4 - core index']
  #allocation1 [shape = 'u32[144,128]{1,0:T(1,128)}', space=vmem, size = 0x12000, scoped, tag = 'internal scratch']
  #allocation2 [shape = 'f32[144,256]{1,0:T(8,128)}', space=vmem, size = 0x24000, scoped, tag = 'scratch operand']
  %s0 = inlined_call_operand.hbm [shape: f32[16,512], index: 0, kind: input, shape index: {}]
  %s1 = inlined_call_operand.hbm [shape: f32[16,144], index: 1, kind: input, shape index: {}]
  %s2 = inlined_call_operand.vmem [shape: f32[16,5], index: 2, kind: input, shape index: {}]
  %s3 = inlined_call_operand.hbm [shape: f32[16,512], index: 3, kind: output, shape index: {}]
  %s4 = sld [smem:[#allocation0]]
  $region53: #{tpu_custom_call.1} parent=0
    _
  %s6 = ssub.s32 1, %s4
  %s7 = scalar_select 0, %s6, %s4
  $region1: #{tpu_custom_call.1} parent=0
    #allocation3 [shape = 'u8[32768]{0}', space=vmem, size = 0x8000, scoped, tag = 'input window, operand 0']
    #allocation4 [shape = 's32[2]{0}', space=sflag, size = 0x8, scoped, tag = 'scoped memory for tpu_custom_call.1']
    #allocation5 [shape = 's32[2]{0}', space=sflag, size = 0x8, scoped, tag = 'scoped memory for tpu_custom_call.1']
    #allocation6 [shape = 'u8[16384]{0}', space=vmem, size = 0x4000, scoped, tag = 'input window, operand 1, single buffered']
    #allocation7 [shape = 's32[1]{0}', space=sflag, size = 0x4, scoped, tag = 'scoped memory for tpu_custom_call.1']
    #allocation8 [shape = 'u8[32768]{0}', space=vmem, size = 0x8000, scoped, tag = 'output window, operand 0']
    %8 = vsyncpa [#allocation4], 0
    %s9 = scalar_lea.sflag [#allocation4], 1
    %10 = vsyncpa %s9, 0
    %11 = vsyncpa [#allocation7], 0
    %12 = vsyncpa [#allocation5], 0
    %s13 = scalar_lea.sflag [#allocation5], 1
    %14 = vsyncpa %s13, 0
    loop: start=0, step=1, limit=4
    $region2: #{tpu_custom_call.1} parent=1 // loop_pre_header
      _
    $region3: #{tpu_custom_call.1} parent=1 // loop_header
      %s16 = sphi 0, %s20
      %p17 = scmp.ge.s32.totalorder %s16, 4
      %s26 = sphi 0, %s28
      %s29 = sphi 0, %s26
      %s30 = sphi 0, %s29
      %s46 = sphi 0, %s30
      %s50 = sphi 0, %s50
      %s52 = sphi 0, %s50
      %s53 = sphi 0, %s52
      %s67 = sphi 0, %s53
      %s71 = sphi 0, %s71
      %s73 = sphi 0, %s71
      %s74 = sphi 0, %s73
      %s88 = sphi 0, %s74
      %s94 = sphi 0, %s96
      %s97 = sphi 0, %s94
      %s98 = sphi 0, %s97
      %s114 = sphi 0, %s98
    $region4: #{tpu_custom_call.1} parent=1 // loop_header_branch
      %19 = sbr.rel (%p17) target = $region8
    $region5: #{tpu_custom_call.1} parent=1 // loop_body
      %s21 = ssub.s32 %s16, 1
      %s22 = ssub.s32 %s16, 2
      %s23 = sadd.s32 %s16, 1
      %s24 = ssub.s32 %s16, %s23
      %p25 = scmp.eq.s32.totalorder %s24, 0
      %s27 = sadd.s32 %s26, 1
      %s28 = scalar_select %p25, %s26, %s27
      %p31 = pneg %p25
      %p32 = scmp.eq.s32.totalorder %s16, 1
      %p33 = por %p31, %p32
      %p34 = scmp.ne.s32.totalorder %s26, %s29
      %p35 = scmp.eq.s32.totalorder %s16, 0
      %p36 = por %p34, %p35
      %p37 = scmp.ne.s32.totalorder %s26, %s29
      %p38 = scmp.eq.s32.totalorder %s21, 1
      %p39 = por %p37, %p38
      %p40 = scmp.ne.s32.totalorder %s29, %s30
      %p41 = scmp.eq.s32.totalorder %s21, 0
      %p42 = por %p40, %p41
      %p43 = scmp.ne.s32.totalorder %s29, %s30
      %p44 = scmp.eq.s32.totalorder %s22, 1
      %p45 = por %p43, %p44
      %p47 = scmp.ne.s32.totalorder %s30, %s46
      %p48 = scmp.eq.s32.totalorder %s22, 0
      %p49 = por %p47, %p48
      %s51 = sadd.s32 %s50, 1
      %p54 = scmp.eq.s32.totalorder %s16, 1
      %p55 = scmp.ne.s32.totalorder %s50, %s52
      %p56 = scmp.eq.s32.totalorder %s16, 0
      %p57 = por %p55, %p56
      %p58 = scmp.ne.s32.totalorder %s50, %s52
      %p59 = scmp.eq.s32.totalorder %s21, 1
      %p60 = por %p58, %p59
      %p61 = scmp.ne.s32.totalorder %s52, %s53
      %p62 = scmp.eq.s32.totalorder %s21, 0
      %p63 = por %p61, %p62
      %p64 = scmp.ne.s32.totalorder %s52, %s53
      %p65 = scmp.eq.s32.totalorder %s22, 1
      %p66 = por %p64, %p65
      %p68 = scmp.ne.s32.totalorder %s53, %s67
      %p69 = scmp.eq.s32.totalorder %s22, 0
      %p70 = por %p68, %p69
      %s72 = sadd.s32 %s71, 1
      %p75 = scmp.eq.s32.totalorder %s16, 1
      %p76 = scmp.ne.s32.totalorder %s71, %s73
      %p77 = scmp.eq.s32.totalorder %s16, 0
      %p78 = por %p76, %p77
      %p79 = scmp.ne.s32.totalorder %s71, %s73
      %p80 = scmp.eq.s32.totalorder %s21, 1
      %p81 = por %p79, %p80
      %p82 = scmp.ne.s32.totalorder %s73, %s74
      %p83 = scmp.eq.s32.totalorder %s21, 0
      %p84 = por %p82, %p83
      %p85 = scmp.ne.s32.totalorder %s73, %s74
      %p86 = scmp.eq.s32.totalorder %s22, 1
      %p87 = por %p85, %p86
      %p89 = scmp.ne.s32.totalorder %s74, %s88
      %p90 = scmp.eq.s32.totalorder %s22, 0
      %p91 = por %p89, %p90
      %s92 = ssub.s32 %s16, %s23
      %p93 = scmp.eq.s32.totalorder %s92, 0
      %s95 = sadd.s32 %s94, 1
      %s96 = scalar_select %p93, %s94, %s95
      %p99 = pneg %p93
      %p100 = scmp.eq.s32.totalorder %s16, 1
      %p101 = por %p99, %p100
      %p102 = scmp.ne.s32.totalorder %s94, %s97
      %p103 = scmp.eq.s32.totalorder %s16, 0
      %p104 = por %p102, %p103
      %p105 = scmp.ne.s32.totalorder %s94, %s97
      %p106 = scmp.eq.s32.totalorder %s21, 1
      %p107 = por %p105, %p106
      %p108 = scmp.ne.s32.totalorder %s97, %s98
      %p109 = scmp.eq.s32.totalorder %s21, 0
      %p110 = por %p108, %p109
      %p111 = scmp.ne.s32.totalorder %s97, %s98
      %p112 = scmp.eq.s32.totalorder %s22, 1
      %p113 = por %p111, %p112
      %p115 = scmp.ne.s32.totalorder %s98, %s114
      %p116 = scmp.eq.s32.totalorder %s22, 0
      %p117 = por %p115, %p116
      %p118 = scmp.le.s32.totalorder 1, %s16
      %p119 = scmp.lt.s32.totalorder %s16, 3
      %p120 = pnand %p118, %p119
      %p121 = pneg %p120
      // Predicated region
      $region9: #{tpu_custom_call.1} parent=5 // pred_check
        _
      $region10: #{tpu_custom_call.1} parent=5 // pred_check_branch
        %123 = sbr.rel (%p120) target = $region12
      $region11: #{tpu_custom_call.1} parent=5 // pred_region
        %s124 = ssub.s32 %s16, 1
        // Predicated region
        $region13: #{tpu_custom_call.1} parent=11 // pred_check
          %p125 = pneg %p63
        $region14: #{tpu_custom_call.1} parent=11 // pred_check_branch
          %127 = sbr.rel (%p125) target = $region16
        $region15: #{tpu_custom_call.1} parent=11 // pred_region
          %s129 = ssub.s32 512, 512
          %130 = vsyncadd [#allocation7], %s129
          %s131 = sshll.u32 [#allocation6], 4
          %s132 = int_to_ptr.vmem [resolvable:$true] %s131
          %137 = dma.hbm_to_vmem [thread:$0]  %s1, 512, %s132, [#allocation7], 256, 256, 16
        $region16: #{tpu_custom_call.1} parent=11 // pred_fallthru
          _
        // Predicated region
        $region17: #{tpu_custom_call.1} parent=11 // pred_check
          %p138 = pneg %p84
        $region18: #{tpu_custom_call.1} parent=11 // pred_check_branch
          %140 = sbr.rel (%p138) target = $region20
        $region19: #{tpu_custom_call.1} parent=11 // pred_region
          _
        $region20: #{tpu_custom_call.1} parent=11 // pred_fallthru
          _
      $region12: #{tpu_custom_call.1} parent=5 // pred_fallthru
        _
      %p141 = scmp.lt.s32.totalorder %s16, 2
      // Predicated region
      $region21: #{tpu_custom_call.1} parent=5 // pred_check
        %p142 = pneg %p141
      $region22: #{tpu_custom_call.1} parent=5 // pred_check_branch
        %144 = sbr.rel (%p142) target = $region24
      $region23: #{tpu_custom_call.1} parent=5 // pred_region
        // Predicated region
        $region25: #{tpu_custom_call.1} parent=23 // pred_check
          %p145 = pneg %p36
        $region26: #{tpu_custom_call.1} parent=23 // pred_check_branch
          %147 = sbr.rel (%p145) target = $region28
        $region27: #{tpu_custom_call.1} parent=23 // pred_region
          %s148 = sand.u32 %s26, 1
          %s149 = scalar_lea.sflag [#allocation4], %s148
          %s150 = sand.u32 %s26, 1
          %s151 = smul.addr %s150, 32
          %s152 = scalar_lea.vmem [#allocation3], %s151
          %s153 = smul.u32 2, %s16
          %s155 = ssub.s32 512, 512
          %156 = vsyncadd %s149, %s155
          %s157 = smul.addr %s153, 128
          %s158 = scalar_lea.hbm %s0, %s157
          %s159 = sshll.u32 %s152, 4
          %s160 = int_to_ptr.vmem [resolvable:$true] %s159
          %165 = dma.hbm_to_vmem [thread:$0]  %s158, 512, %s160, %s149, 512, 256, 16
        $region28: #{tpu_custom_call.1} parent=23 // pred_fallthru
          _
      $region24: #{tpu_custom_call.1} parent=5 // pred_fallthru
        _
      %p166 = scmp.le.s32.totalorder 1, %s16
      %p167 = scmp.lt.s32.totalorder %s16, 3
      %p168 = pnand %p166, %p167
      %p169 = pneg %p168
      // Predicated region
      $region29: #{tpu_custom_call.1} parent=5 // pred_check
        _
      $region30: #{tpu_custom_call.1} parent=5 // pred_check_branch
        %171 = sbr.rel (%p168) target = $region32
      $region31: #{tpu_custom_call.1} parent=5 // pred_region
        %s172 = ssub.s32 %s16, 1
        %s173 = sand.u32 %s29, 1
        %s174 = scalar_lea.sflag [#allocation4], %s173
        %s175 = sand.u32 %s29, 1
        %s176 = smul.addr %s175, 32
        %s177 = scalar_lea.vmem [#allocation3], %s176
        // Predicated region
        $region33: #{tpu_custom_call.1} parent=31 // pred_check
          %p178 = pneg %p42
        $region34: #{tpu_custom_call.1} parent=31 // pred_check_branch
          %180 = sbr.rel (%p178) target = $region36
        $region35: #{tpu_custom_call.1} parent=31 // pred_region
          %181 = dma.done %s174, 512
        $region36: #{tpu_custom_call.1} parent=31 // pred_fallthru
          _
        // Predicated region
        $region37: #{tpu_custom_call.1} parent=31 // pred_check
          %p182 = pneg %p63
        $region38: #{tpu_custom_call.1} parent=31 // pred_check_branch
          %184 = sbr.rel (%p182) target = $region40
        $region39: #{tpu_custom_call.1} parent=31 // pred_region
          %185 = dma.done [#allocation7], 512
        $region40: #{tpu_custom_call.1} parent=31 // pred_fallthru
          _
        %s186 = sand.u32 %s29, 1
        %s187 = scalar_lea.sflag [#allocation4], %s186
        %s188 = sand.u32 %s29, 1
        %s189 = smul.addr %s188, 32
        %s190 = scalar_lea.vmem [#allocation3], %s189
        %p191 = pneg %p42
        %p192 = pneg %p39
        %p193 = pneg %p63
        %p194 = pneg %p60
        %p195 = pneg %p84
        %p196 = pneg %p81
        %p197 = pneg %p110
        %p198 = pneg %p107
        %s199 = sand.u32 %s97, 1
        %s200 = scalar_lea.sflag [#allocation5], %s199
        %s201 = sand.u32 %s97, 1
        %s202 = smul.addr %s201, 32
        %s203 = scalar_lea.vmem [#allocation8], %s202
        %s204 = smul.u32 2, %s21
        %s205 = smul.u32 2, %s21
        %v206 = vlaneseq
        %v207 = vand.u32 %v206, 127
        %v208 = vadd.s32 %v207, 128
        %v209 = vand.u32 %v207, 255
        %v210 = vand.u32 %v208, 255
        %v211 = vand.u32 %v209, 15
        %v212 = vand.u32 %v210, 15
        %v213 = vshra.s32 %v209, 4
        %v214 = vshra.s32 %v210, 4
        %v215 = vld [vmem:[#allocation6] sm:$0xff]
        %v216 = vld [vmem:[#allocation6 + $0x8] sm:$0xff]
        %v217 = vld [vmem:[#allocation6 + $0x10] sm:$0xff]
        %v218 = vld [vmem:[#allocation6 + $0x18] sm:$0xff]
        %v219 = vld [vmem:[%s2] sm:$0xff]
        %v220 = vld [vmem:[%s2 + $0x8] sm:$0xff]
        %v221 = vld [vmem:[%s2] sm:$0x1]
        %v222 = vld [vmem:[%s177] sm:$0xff]
        %v223 = vld [vmem:[%s177 + $0x8] sm:$0xff]
        %v224 = vld [vmem:[%s177 + $0x10] sm:$0xff]
        %v225 = vld [vmem:[%s177 + $0x18] sm:$0xff]
        %226 = vrot.lane.b32.xlu0 %v222, 17
        %v227 = vpop.permute.xlu0 %226
        %228 = vrot.lane.b32.xlu0 %v224, 17
        %v229 = vpop.permute.xlu0 %228
        %230 = vrot.lane.b32.xlu0 %v223, 17
        %v231 = vpop.permute.xlu0 %230
        %232 = vrot.lane.b32.xlu0 %v225, 17
        %v233 = vpop.permute.xlu0 %232
        %vm234 = vcmp.lt.s32.totalorder %v207, 17
        %v235 = vsel %vm234, %v227, %v231
        %v236 = vsel %vm234, %v229, %v233
        %v237 = vsel %vm234, %v231, %v227
        %v238 = vsel %vm234, %v233, %v229
        %vm239 = vcmp.ge.s32.totalorder %v213, 1
        %vm240 = vcmp.ge.s32.totalorder %v214, 1
        %vm241 = vcmp.ge.s32.totalorder %v211, 1
        %vm242 = vcmp.ge.s32.totalorder %v212, 1
        %vm243 = vmand %vm239, %vm241
        %vm244 = vmand %vm240, %vm242
        %v245 = vsel %vm243, 1, 0
        %v246 = vsel %vm244, 1, 0
        %vm247 = vcmp.eq.s32.totalorder %v245, 1
        %vm248 = vcmp.eq.s32.totalorder %v246, 1
        %v249 = vsel %vm247, %v237, 0.0
        %v250 = vsel %vm248, %v235, 0.0
        %v251 = vsel %vm247, %v238, 0.0
        %v252 = vsel %vm248, %v236, 0.0
        %253 = vst [vmem:[#allocation2] sm:$0xff] %v249
        %254 = vst [vmem:[#allocation2 + $0x8] sm:$0xff] %v250
        %255 = vst [vmem:[#allocation2 + $0x10] sm:$0xff] %v251
        %256 = vst [vmem:[#allocation2 + $0x18] sm:$0xff] %v252
        %257 = vrot.lane.b32.xlu0 %v222, 16
        %v258 = vpop.permute.xlu0 %257
        %259 = vrot.lane.b32.xlu0 %v224, 16
        %v260 = vpop.permute.xlu0 %259
        %261 = vrot.lane.b32.xlu0 %v223, 16
        %v262 = vpop.permute.xlu0 %261
        %263 = vrot.lane.b32.xlu0 %v225, 16
        %v264 = vpop.permute.xlu0 %263
        %vm265 = vcmp.lt.s32.totalorder %v207, 16
        %v266 = vsel %vm265, %v258, %v262
        %v267 = vsel %vm265, %v260, %v264
        %v268 = vsel %vm265, %v262, %v258
        %v269 = vsel %vm265, %v264, %v260
        %v270 = vsel %vm239, 1, 0
        %v271 = vsel %vm240, 1, 0
        %vm272 = vcmp.eq.s32.totalorder %v270, 1
        %vm273 = vcmp.eq.s32.totalorder %v271, 1
        %v274 = vsel %vm272, %v268, 0.0
        %v275 = vsel %vm273, %v266, 0.0
        %v276 = vsel %vm272, %v269, 0.0
        %v277 = vsel %vm273, %v267, 0.0
        %278 = vst [vmem:[#allocation2 + $0x20] sm:$0xff] %v274
        %279 = vst [vmem:[#allocation2 + $0x28] sm:$0xff] %v275
        %280 = vst [vmem:[#allocation2 + $0x30] sm:$0xff] %v276
        %281 = vst [vmem:[#allocation2 + $0x38] sm:$0xff] %v277
        %282 = vrot.lane.b32.xlu0 %v222, 15
        %v283 = vpop.permute.xlu0 %282
        %284 = vrot.lane.b32.xlu0 %v224, 15
        %v285 = vpop.permute.xlu0 %284
        %286 = vrot.lane.b32.xlu0 %v223, 15
        %v287 = vpop.permute.xlu0 %286
        %288 = vrot.lane.b32.xlu0 %v225, 15
        %v289 = vpop.permute.xlu0 %288
        %vm290 = vcmp.lt.s32.totalorder %v207, 15
        %v291 = vsel %vm290, %v283, %v287
        %v292 = vsel %vm290, %v285, %v289
        %v293 = vsel %vm290, %v287, %v283
        %v294 = vsel %vm290, %v289, %v285
        %vm295 = vcmp.lt.s32.totalorder %v211, 15
        %vm296 = vcmp.lt.s32.totalorder %v212, 15
        %vm297 = vmand %vm239, %vm295
        %vm298 = vmand %vm240, %vm296
        %v299 = vsel %vm297, 1, 0
        %v300 = vsel %vm298, 1, 0
        %vm301 = vcmp.eq.s32.totalorder %v299, 1
        %vm302 = vcmp.eq.s32.totalorder %v300, 1
        %v303 = vsel %vm301, %v293, 0.0
        %v304 = vsel %vm302, %v291, 0.0
        %v305 = vsel %vm301, %v294, 0.0
        %v306 = vsel %vm302, %v292, 0.0
        %307 = vst [vmem:[#allocation2 + $0x40] sm:$0xff] %v303
        %308 = vst [vmem:[#allocation2 + $0x48] sm:$0xff] %v304
        %309 = vst [vmem:[#allocation2 + $0x50] sm:$0xff] %v305
        %310 = vst [vmem:[#allocation2 + $0x58] sm:$0xff] %v306
        %311 = vrot.lane.b32.xlu0 %v222, 1
        %v312 = vpop.permute.xlu0 %311
        %313 = vrot.lane.b32.xlu0 %v224, 1
        %v314 = vpop.permute.xlu0 %313
        %315 = vrot.lane.b32.xlu0 %v223, 1
        %v316 = vpop.permute.xlu0 %315
        %317 = vrot.lane.b32.xlu0 %v225, 1
        %v318 = vpop.permute.xlu0 %317
        %vm319 = vcmp.lt.s32.totalorder %v207, 1
        %v320 = vsel %vm319, %v312, %v316
        %v321 = vsel %vm319, %v314, %v318
        %v322 = vsel %vm319, %v316, %v312
        %v323 = vsel %vm319, %v318, %v314
        %v324 = vsel %vm241, 1, 0
        %v325 = vsel %vm242, 1, 0
        %vm326 = vcmp.eq.s32.totalorder %v324, 1
        %vm327 = vcmp.eq.s32.totalorder %v325, 1
        %v328 = vsel %vm326, %v322, 0.0
        %v329 = vsel %vm327, %v320, 0.0
        %v330 = vsel %vm326, %v323, 0.0
        %v331 = vsel %vm327, %v321, 0.0
        %332 = vst [vmem:[#allocation2 + $0x60] sm:$0xff] %v328
        %333 = vst [vmem:[#allocation2 + $0x68] sm:$0xff] %v329
        %334 = vst [vmem:[#allocation2 + $0x70] sm:$0xff] %v330
        %335 = vst [vmem:[#allocation2 + $0x78] sm:$0xff] %v331
        %336 = vst [vmem:[#allocation2 + $0x80] sm:$0xff] %v222
        %337 = vst [vmem:[#allocation2 + $0x88] sm:$0xff] %v223
        %338 = vst [vmem:[#allocation2 + $0x90] sm:$0xff] %v224
        %339 = vst [vmem:[#allocation2 + $0x98] sm:$0xff] %v225
        %340 = vrot.lane.b32.xlu0 %v222, 127
        %v341 = vpop.permute.xlu0 %340
        %342 = vrot.lane.b32.xlu0 %v224, 127
        %v343 = vpop.permute.xlu0 %342
        %344 = vrot.lane.b32.xlu0 %v223, 127
        %v345 = vpop.permute.xlu0 %344
        %346 = vrot.lane.b32.xlu0 %v225, 127
        %v347 = vpop.permute.xlu0 %346
        %vm348 = vcmp.lt.s32.totalorder %v207, 127
        %v349 = vsel %vm348, %v341, %v345
        %v350 = vsel %vm348, %v343, %v347
        %v351 = vsel %vm348, %v345, %v341
        %v352 = vsel %vm348, %v347, %v343
        %v353 = vsel %vm295, 1, 0
        %v354 = vsel %vm296, 1, 0
        %vm355 = vcmp.eq.s32.totalorder %v353, 1
        %vm356 = vcmp.eq.s32.totalorder %v354, 1
        %v357 = vsel %vm355, %v349, 0.0
        %v358 = vsel %vm356, %v351, 0.0
        %v359 = vsel %vm355, %v350, 0.0
        %v360 = vsel %vm356, %v352, 0.0
        %361 = vst [vmem:[#allocation2 + $0xa0] sm:$0xff] %v357
        %362 = vst [vmem:[#allocation2 + $0xa8] sm:$0xff] %v358
        %363 = vst [vmem:[#allocation2 + $0xb0] sm:$0xff] %v359
        %364 = vst [vmem:[#allocation2 + $0xb8] sm:$0xff] %v360
        %365 = vrot.lane.b32.xlu0 %v222, 113
        %v366 = vpop.permute.xlu0 %365
        %367 = vrot.lane.b32.xlu0 %v224, 113
        %v368 = vpop.permute.xlu0 %367
        %369 = vrot.lane.b32.xlu0 %v223, 113
        %v370 = vpop.permute.xlu0 %369
        %371 = vrot.lane.b32.xlu0 %v225, 113
        %v372 = vpop.permute.xlu0 %371
        %vm373 = vcmp.lt.s32.totalorder %v207, 113
        %v374 = vsel %vm373, %v366, %v370
        %v375 = vsel %vm373, %v368, %v372
        %v376 = vsel %vm373, %v370, %v366
        %v377 = vsel %vm373, %v372, %v368
        %vm378 = vcmp.lt.s32.totalorder %v213, 15
        %vm379 = vcmp.lt.s32.totalorder %v214, 15
        %vm380 = vmand %vm378, %vm241
        %vm381 = vmand %vm379, %vm242
        %v382 = vsel %vm380, 1, 0
        %v383 = vsel %vm381, 1, 0
        %vm384 = vcmp.eq.s32.totalorder %v382, 1
        %vm385 = vcmp.eq.s32.totalorder %v383, 1
        %v386 = vsel %vm384, %v374, 0.0
        %v387 = vsel %vm385, %v376, 0.0
        %v388 = vsel %vm384, %v375, 0.0
        %v389 = vsel %vm385, %v377, 0.0
        %390 = vst [vmem:[#allocation2 + $0xc0] sm:$0xff] %v386
        %391 = vst [vmem:[#allocation2 + $0xc8] sm:$0xff] %v387
        %392 = vst [vmem:[#allocation2 + $0xd0] sm:$0xff] %v388
        %393 = vst [vmem:[#allocation2 + $0xd8] sm:$0xff] %v389
        %394 = vrot.lane.b32.xlu0 %v222, 112
        %v395 = vpop.permute.xlu0 %394
        %396 = vrot.lane.b32.xlu0 %v224, 112
        %v397 = vpop.permute.xlu0 %396
        %398 = vrot.lane.b32.xlu0 %v223, 112
        %v399 = vpop.permute.xlu0 %398
        %400 = vrot.lane.b32.xlu0 %v225, 112
        %v401 = vpop.permute.xlu0 %400
        %vm402 = vcmp.lt.s32.totalorder %v207, 112
        %v403 = vsel %vm402, %v395, %v399
        %v404 = vsel %vm402, %v397, %v401
        %v405 = vsel %vm402, %v399, %v395
        %v406 = vsel %vm402, %v401, %v397
        %v407 = vsel %vm378, 1, 0
        %v408 = vsel %vm379, 1, 0
        %vm409 = vcmp.eq.s32.totalorder %v407, 1
        %vm410 = vcmp.eq.s32.totalorder %v408, 1
        %v411 = vsel %vm409, %v403, 0.0
        %v412 = vsel %vm410, %v405, 0.0
        %v413 = vsel %vm409, %v404, 0.0
        %v414 = vsel %vm410, %v406, 0.0
        %415 = vst [vmem:[#allocation2 + $0xe0] sm:$0xff] %v411
        %416 = vst [vmem:[#allocation2 + $0xe8] sm:$0xff] %v412
        %417 = vst [vmem:[#allocation2 + $0xf0] sm:$0xff] %v413
        %418 = vst [vmem:[#allocation2 + $0xf8] sm:$0xff] %v414
        %419 = vrot.lane.b32.xlu0 %v222, 111
        %v420 = vpop.permute.xlu0 %419
        %421 = vrot.lane.b32.xlu0 %v224, 111
        %v422 = vpop.permute.xlu0 %421
        %423 = vrot.lane.b32.xlu0 %v223, 111
        %v424 = vpop.permute.xlu0 %423
        %425 = vrot.lane.b32.xlu0 %v225, 111
        %v426 = vpop.permute.xlu0 %425
        %vm427 = vcmp.lt.s32.totalorder %v207, 111
        %v428 = vsel %vm427, %v420, %v424
        %v429 = vsel %vm427, %v422, %v426
        %v430 = vsel %vm427, %v424, %v420
        %v431 = vsel %vm427, %v426, %v422
        %vm432 = vmand %vm378, %vm295
        %vm433 = vmand %vm379, %vm296
        %v434 = vsel %vm432, 1, 0
        %v435 = vsel %vm433, 1, 0
        %vm436 = vcmp.eq.s32.totalorder %v434, 1
        %vm437 = vcmp.eq.s32.totalorder %v435, 1
        %v438 = vsel %vm436, %v428, 0.0
        %v439 = vsel %vm437, %v430, 0.0
        %v440 = vsel %vm436, %v429, 0.0
        %v441 = vsel %vm437, %v431, 0.0
        %442 = vst [vmem:[#allocation2 + $0x100] sm:$0xff] %v438
        %443 = vst [vmem:[#allocation2 + $0x108] sm:$0xff] %v439
        %444 = vst [vmem:[#allocation2 + $0x110] sm:$0xff] %v440
        %445 = vst [vmem:[#allocation2 + $0x118] sm:$0xff] %v441
        %v446 = vld [vmem:[#allocation2] sm:$0xff]
        %v447 = vld [vmem:[#allocation2 + $0x8] sm:$0xff]
        %v448 = vld [vmem:[#allocation2 + $0x10] sm:$0xff]
        %v449 = vld [vmem:[#allocation2 + $0x18] sm:$0xff]
        %v450 = vld [vmem:[#allocation2 + $0x20] sm:$0xff]
        %v451 = vld [vmem:[#allocation2 + $0x28] sm:$0xff]
        %v452 = vld [vmem:[#allocation2 + $0x30] sm:$0xff]
        %v453 = vld [vmem:[#allocation2 + $0x38] sm:$0xff]
        %v454 = vld [vmem:[#allocation2 + $0x40] sm:$0xff]
        %v455 = vld [vmem:[#allocation2 + $0x48] sm:$0xff]
        %v456 = vld [vmem:[#allocation2 + $0x50] sm:$0xff]
        %v457 = vld [vmem:[#allocation2 + $0x58] sm:$0xff]
        %v458 = vld [vmem:[#allocation2 + $0x60] sm:$0xff]
        %v459 = vld [vmem:[#allocation2 + $0x68] sm:$0xff]
        %v460 = vld [vmem:[#allocation2 + $0x70] sm:$0xff]
        %v461 = vld [vmem:[#allocation2 + $0x78] sm:$0xff]
        %v462 = vld [vmem:[#allocation2 + $0x80] sm:$0xff]
        %v463 = vld [vmem:[#allocation2 + $0x88] sm:$0xff]
        %v464 = vld [vmem:[#allocation2 + $0x90] sm:$0xff]
        %v465 = vld [vmem:[#allocation2 + $0x98] sm:$0xff]
        %v466 = vld [vmem:[#allocation2 + $0xa0] sm:$0xff]
        %v467 = vld [vmem:[#allocation2 + $0xa8] sm:$0xff]
        %v468 = vld [vmem:[#allocation2 + $0xb0] sm:$0xff]
        %v469 = vld [vmem:[#allocation2 + $0xb8] sm:$0xff]
        %v470 = vld [vmem:[#allocation2 + $0xc0] sm:$0xff]
        %v471 = vld [vmem:[#allocation2 + $0xc8] sm:$0xff]
        %v472 = vld [vmem:[#allocation2 + $0xd0] sm:$0xff]
        %v473 = vld [vmem:[#allocation2 + $0xd8] sm:$0xff]
        %v474 = vld [vmem:[#allocation2 + $0xe0] sm:$0xff]
        %v475 = vld [vmem:[#allocation2 + $0xe8] sm:$0xff]
        %v476 = vld [vmem:[#allocation2 + $0xf0] sm:$0xff]
        %v477 = vld [vmem:[#allocation2 + $0xf8] sm:$0xff]
        %v478 = vld [vmem:[#allocation2 + $0x100] sm:$0xff]
        %v479 = vld [vmem:[#allocation2 + $0x108] sm:$0xff]
        %v480 = vld [vmem:[#allocation2 + $0x110] sm:$0xff]
        %v481 = vld [vmem:[#allocation2 + $0x118] sm:$0xff]
        %483 = vset.pattern.permute.xlu0 0
        %484 = vperm.xlu0 %483, %v219
        %v485 = vpop.permute.xlu0 %484
        %488 = vset.pattern.permute.xlu0 0
        %489 = vperm.xlu0 %488, %v220
        %v490 = vpop.permute.xlu0 %489
        %vm492 = vcmask 130048
        %v494 = vsel %vm492, %v216, 0
        %v497 = vsel %vm492, %v218, 0
        %499 = vmatprep.subr.mxu0 %v447
        %500 = vmatpush1.msra.mxu0 %v446
        %501 = vmatprep.subr.mxu0 %v449
        %502 = vmatpush1.msra.mxu0 %v448
        %503 = vmatprep.subr.mxu0 %v451
        %504 = vmatpush1.msra.mxu0 %v450
        %505 = vmatprep.subr.mxu0 %v453
        %506 = vmatpush1.msra.mxu0 %v452
        %507 = vmatprep.subr.mxu0 %v455
        %508 = vmatpush1.msra.mxu0 %v454
        %509 = vmatprep.subr.mxu0 %v457
        %510 = vmatpush1.msra.mxu0 %v456
        %511 = vmatprep.subr.mxu0 %v459
        %512 = vmatpush1.msra.mxu0 %v458
        %513 = vmatprep.subr.mxu0 %v461
        %514 = vmatpush1.msra.mxu0 %v460
        %515 = vmatprep.subr.mxu0 %v463
        %516 = vmatpush1.msra.mxu0 %v462
        %517 = vmatprep.subr.mxu0 %v465
        %518 = vmatpush1.msra.mxu0 %v464
        %519 = vmatprep.subr.mxu0 %v467
        %520 = vmatpush1.msra.mxu0 %v466
        %521 = vmatprep.subr.mxu0 %v469
        %522 = vmatpush1.msra.mxu0 %v468
        %523 = vmatprep.subr.mxu0 %v471
        %524 = vmatpush1.msra.mxu0 %v470
        %525 = vmatprep.subr.mxu0 %v473
        %526 = vmatpush1.msra.mxu0 %v472
        %527 = vmatprep.subr.mxu0 %v475
        %528 = vmatpush1.msra.mxu0 %v474
        %529 = vmatprep.subr.mxu0 %v477
        %530 = vmatpush1.msra.mxu0 %v476
        %531 = vmatprep.subr.mxu0 %v479
        %532 = vmatpush1.msra.mxu0 %v478
        %533 = vmatprep.subr.mxu0 %v481
        %534 = vmatpush1.msra.mxu0 %v480
        %535 = vmatprep.subr.mxu0 0.0
        %536 = vmatpush1.msra.mxu0 0.0
        %537 = vmatprep.subr.mxu0 0.0
        %538 = vmatpush1.msra.mxu0 0.0
        %539 = vmatprep.subr.mxu0 0.0
        %540 = vmatpush1.msra.mxu0 0.0
        %541 = vmatprep.subr.mxu0 0.0
        %542 = vmatpush1.msra.mxu0 0.0
        %543 = vmatprep.subr.mxu0 0.0
        %544 = vmatpush1.msra.mxu0 0.0
        %545 = vmatprep.subr.mxu0 0.0
        %546 = vmatpush1.msra.mxu0 0.0
        %547 = vmatprep.subr.mxu0 0.0
        %548 = vmatpush1.msra.mxu0 0.0
        %549 = vmatprep.subr.mxu0 0.0
        %550 = vmatpush1.msra.mxu0 0.0
        %551 = vmatprep.subr.mxu0 0.0
        %552 = vmatpush1.msra.mxu0 0.0
        %553 = vmatprep.subr.mxu0 0.0
        %554 = vmatpush1.msra.mxu0 0.0
        %555 = vmatprep.subr.mxu0 0.0
        %556 = vmatpush1.msra.mxu0 0.0
        %557 = vmatprep.subr.mxu0 0.0
        %558 = vmatpush1.msra.mxu0 0.0
        %559 = vmatprep.subr.mxu0 0.0
        %560 = vmatpush1.msra.mxu0 0.0
        %561 = vmatprep.subr.mxu0 0.0
        %562 = vmatpush1.msra.mxu0 0.0
        %563 = vmatprep.mubr.f32.mxu0 %v494
        %564 = vmatmul.mubr.f32.gmra.mrb[0].mxu0 %v215
        %v565 = vpop.f32.mrb[0].mxu0
        %v566 = vadd.f32 %v485, %v565
        %v567 = vpop.f32.mrb[0].mxu0
        %v568 = vadd.f32 %v485, %v567
        %569 = vmatprep.mubr.f32.mxu0 %v497
        %570 = vmatmul.mubr.f32.gmra.mrb[0].mxu0 %v217
        %v571 = vpop.f32.mrb[0].mxu0
        %v572 = vadd.f32 %v490, %v571
        %v573 = vpop.f32.mrb[0].mxu0
        %v574 = vadd.f32 %v490, %v573
        %575 = vdwg.mxu0
        %v576 = vadd.f32 %v566, %v568
        %577 = vadd.xlane.f32.xlu0 %v576
        %v578 = vpop.xlane.xlu0 %577
        %v579 = vadd.f32 %v572, %v574
        %580 = vadd.xlane.f32.xlu0 %v579
        %v581 = vpop.xlane.xlu0 %580
        %v582 = vrcp.pop 256.0
        %v583 = vmul.f32 %v578, %v582
        %v584 = vmul.f32 %v581, %v582
        %v585 = vmul.f32 %v583, %v219
        %v586 = vmul.f32 %v584, %v220
        %vm587 = vcmask 15368
        %v588 = vsel %vm587, %v585, 0.0
        %v589 = vsel %vm587, %v586, 0.0
        %v590 = vadd.f32 %v588, %v589
        %v591 = vrot.slane %v590, 4
        %v592 = vadd.f32 %v590, %v591
        %v593 = vrot.slane %v592, 2
        %v594 = vadd.f32 %v592, %v593
        %v595 = vrot.slane %v594, 1
        %v596 = vadd.f32 %v594, %v595
        %598 = vrot.lane.b32.xlu0 %v221, 125
        %v599 = vpop.permute.xlu0 %598
        %v601 = vadd.f32 %v596, %v599
        %v602 = vmax.f32 %v601, 0.0
        %v603 = vlaneseq
        %v604 = vshrl.u32 %v603, 7
        %v605 = vsub.s32 0, %v604
        %v606 = vrot.slane %v602, %v605
        %607 = vrot.lane.b32.xlu0 %v219, 127
        %v608 = vpop.permute.xlu0 %607
        %609 = vrot.lane.b32.xlu0 %v220, 127
        %v610 = vpop.permute.xlu0 %609
        %v613 = vmul.f32 %v606, %v608
        %v614 = vmul.f32 %v606, %v610
        %v615 = vadd.f32 %v613, 0.0
        %v616 = vadd.f32 %v614, 0.0
        %617 = vrot.lane.b32.xlu0 %v219, 126
        %v618 = vpop.permute.xlu0 %617
        %619 = vrot.lane.b32.xlu0 %v220, 126
        %v620 = vpop.permute.xlu0 %619
        %v623 = vadd.f32 %v615, %v618
        %v624 = vadd.f32 %v616, %v620
        %v625 = vxor.u32 %v623, 2147483648
        %v626 = vxor.u32 %v624, 2147483648
        %v627 = vmul.f32 %v625, 1.442695
        %v628 = vpow.pop %v627
        %v629 = vmul.f32 %v626, 1.442695
        %v630 = vpow.pop %v629
        %v631 = vadd.f32 %v628, 1.0
        %v632 = vadd.f32 %v630, 1.0
        %v633 = vrcp.pop %v631
        %v634 = vmul.f32 1.0, %v633
        %v635 = vrcp.pop %v632
        %v636 = vmul.f32 1.0, %v635
        %638 = vset.pattern.permute.xlu0 1
        %639 = vperm.xlu0 %638, %v634
        %v640 = vpop.permute.xlu0 %639
        %643 = vset.pattern.permute.xlu0 1
        %644 = vperm.xlu0 %643, %v636
        %v645 = vpop.permute.xlu0 %644
        %v647 = vmul.f32 %v566, %v640
        %v648 = vmul.f32 %v568, %v640
        %v649 = vmul.f32 %v572, %v645
        %v650 = vmul.f32 %v574, %v645
        %v651 = vmax.f32 %v647, 0.0
        %v652 = vmax.f32 %v648, 0.0
        %v653 = vmax.f32 %v649, 0.0
        %v654 = vmax.f32 %v650, 0.0
        %655 = vst [vmem:[%s203] sm:$0xff] %v651
        %656 = vst [vmem:[%s203 + $0x8] sm:$0xff] %v652
        %657 = vst [vmem:[%s203 + $0x10] sm:$0xff] %v653
        %658 = vst [vmem:[%s203 + $0x18] sm:$0xff] %v654
        %s659 = sand.u32 %s97, 1
        %s660 = scalar_lea.sflag [#allocation5], %s659
        %s661 = sand.u32 %s97, 1
        %s662 = smul.addr %s661, 32
        %s663 = scalar_lea.vmem [#allocation8], %s662
        // Predicated region
        $region41: #{tpu_custom_call.1} parent=31 // pred_check
          %p664 = pneg %p107
        $region42: #{tpu_custom_call.1} parent=31 // pred_check_branch
          %666 = sbr.rel (%p664) target = $region44
        $region43: #{tpu_custom_call.1} parent=31 // pred_region
          %s667 = smul.u32 2, %s21
          %s669 = ssub.s32 512, 512
          %670 = vsyncadd %s660, %s669
          %s671 = smul.addr %s667, 128
          %s672 = scalar_lea.hbm %s3, %s671
          %s673 = sshll.u32 %s663, 4
          %s674 = int_to_ptr.vmem [resolvable:$true] %s673
          %679 = dma.vmem_to_hbm [thread:$0]  %s674, 512, %s672, %s660, 256, 512, 16
        $region44: #{tpu_custom_call.1} parent=31 // pred_fallthru
          _
      $region32: #{tpu_custom_call.1} parent=5 // pred_fallthru
        _
      %p680 = scmp.le.s32.totalorder 2, %s16
      // Predicated region
      $region45: #{tpu_custom_call.1} parent=5 // pred_check
        %p681 = pneg %p680
      $region46: #{tpu_custom_call.1} parent=5 // pred_check_branch
        %683 = sbr.rel (%p681) target = $region48
      $region47: #{tpu_custom_call.1} parent=5 // pred_region
        %s684 = ssub.s32 %s16, 2
        // Predicated region
        $region49: #{tpu_custom_call.1} parent=47 // pred_check
          %p685 = pneg %p113
        $region50: #{tpu_custom_call.1} parent=47 // pred_check_branch
          %687 = sbr.rel (%p685) target = $region52
        $region51: #{tpu_custom_call.1} parent=47 // pred_region
          %s688 = sand.u32 %s98, 1
          %s689 = scalar_lea.sflag [#allocation5], %s688
          %s690 = sand.u32 %s98, 1
          %s691 = smul.addr %s690, 32
          %s692 = scalar_lea.vmem [#allocation8], %s691
          %693 = dma.done %s689, 512
        $region52: #{tpu_custom_call.1} parent=47 // pred_fallthru
          _
      $region48: #{tpu_custom_call.1} parent=5 // pred_fallthru
        _
    $region6: #{tpu_custom_call.1} parent=1 // loop_footer
      %s20 = sadd.s32 1, %s16
    $region7: #{tpu_custom_call.1} parent=1 // loop_footer_branch
      %15 = sbr.rel target = $region3
    $region8: #{tpu_custom_call.1} parent=1 // loop_exit
      _
    %694 = vsyncpa [#allocation4], 1
    %s695 = scalar_lea.sflag [#allocation4], 1
    %696 = vsyncpa %s695, 1
    %697 = vsyncpa [#allocation7], 1
    %698 = vsyncpa [#allocation5], 1
    %s699 = scalar_lea.sflag [#allocation5], 1
    %700 = vsyncpa %s699, 1

</llo_original>
